<compile_context>
chip_gen: v6e
topology: v6e:2x2x1
jax: 0.10.0
libtpu: 0.0.40
codegen_flags: <defaults>
</compile_context>

<pallas_src>
import functools

import jax
import jax.numpy as jnp
from jax.experimental import pallas as pl
from jax.experimental.pallas import tpu as pltpu


def _round_up(x, m):
    return ((x + m - 1) // m) * m


# ---------------------------------------------------------------------------
# Fused MLP kernel: h = x ; for each layer: h = relu(W_l @ h + b_l)
# refs = (x_ref, w1_ref, b1_ref, w2_ref, b2_ref, ..., out_ref)
#   x_ref   : (1, Cin, tile_N)   bf16
#   w_l     : (Cout_l, Cin_l)    bf16  (torch Conv1d layout, no transpose)
#   b_l     : (Cout_l, 1)        f32
#   out_ref : (1, Cout, tile_N)  out_dtype
# ---------------------------------------------------------------------------
def _mlp_kernel(*refs, n_layers, dot_dtype):
    x_ref = refs[0]
    out_ref = refs[-1]

    h = x_ref[0]                                          # (Cin, tile_N) bf16
    for li in range(n_layers):
        w_ref = refs[1 + 2 * li]
        b_ref = refs[2 + 2 * li]
        # (Cout_l, Cin_l) @ (Cin_l, tile_N) -> (Cout_l, tile_N), f32 accumulate.
        y = jnp.dot(w_ref[...], h, preferred_element_type=jnp.float32)
        y = y + b_ref[...]                                # bias bcast over lanes
        h = jnp.maximum(y, 0.0)                           # ReLU (VPU, f32)
        if li < n_layers - 1:
            h = h.astype(dot_dtype)                       # next matmul input
    out_ref[0] = h.astype(out_ref.dtype)


# ---------------------------------------------------------------------------
# Wrapper: layout plumbing + single pallas_call
# ---------------------------------------------------------------------------
def mlpnet_relu_forward(x, weights, biases, *, tile_n=2048,
                        dot_dtype=jnp.bfloat16, out_dtype=jnp.float32):
    """x: (B, Cin, N) or (B, Cin).
    weights[l]: (Cout_l, Cin_l)  (torch Conv1d weight[..., 0], no transpose).
    biases[l]:  (Cout_l,)."""
    squeeze_last = (x.ndim == 2)
    if squeeze_last:
        # [B, Cin] path: channels on the sublane axis, batch on the lane axis.
        x = jnp.transpose(x, (1, 0))[None]                # (1, Cin, B) — tiny

    B, Cin, N = x.shape
    n_layers = len(weights)
    assert Cin == weights[0].shape[1]
    Cout = weights[-1].shape[0]

    # Cast activations once in the wrapper (halves input HBM traffic; the
    # kernel never casts its inputs).
    if x.dtype != dot_dtype:
        x = x.astype(dot_dtype)

    # Lane tiling along N: multiple of 128, padded so the grid divides evenly.
    tile = _round_up(min(tile_n, _round_up(N, 128)), 128)
    # v7x has 2 TensorCores: keep the "parallel" grid at >= 2 steps if we can.
    if B == 1 and N > 128 and _round_up(N, tile) // tile < 2:
        tile = _round_up(pl.cdiv(N, 2), 128)
    padded_n = _round_up(N, tile)
    if padded_n != N:
        x = jnp.pad(x, ((0, 0), (0, 0), (0, padded_n - N)))

    grid = (B, padded_n // tile)

    in_specs = [pl.BlockSpec((1, Cin, tile), lambda b, j: (b, 0, j))]
    args = [x]
    for w, bias in zip(weights, biases):
        co, ci = w.shape
        # Weights/biases are resident (same block index every step -> one DMA);
        # pre-cast weights to bf16 so there is no per-step cast and half VMEM.
        in_specs.append(pl.BlockSpec((co, ci), lambda b, j: (0, 0)))
        in_specs.append(pl.BlockSpec((co, 1), lambda b, j: (0, 0)))
        args.append(w.astype(dot_dtype))
        args.append(bias.reshape(co, 1).astype(jnp.float32))

    kern = functools.partial(_mlp_kernel, n_layers=n_layers,
                             dot_dtype=dot_dtype)

    out = pl.pallas_call(
        kern,
        out_shape=jax.ShapeDtypeStruct((B, Cout, padded_n), out_dtype),
        grid=grid,
        in_specs=in_specs,
        out_specs=pl.BlockSpec((1, Cout, tile), lambda b, j: (b, 0, j)),
        compiler_params=pltpu.CompilerParams(
            dimension_semantics=("parallel", "parallel")),
    )(*args)

    if padded_n != N:
        out = out[:, :, :N]
    if squeeze_last:
        out = jnp.transpose(out[0], (1, 0))               # (B, Cout)
    return out


# ---------------------------------------------------------------------------
# Pure-JAX reference (f32) for a numerics check.
# ---------------------------------------------------------------------------
def mlpnet_relu_reference(x, weights, biases):
    squeeze_last = (x.ndim == 2)
    h = x.astype(jnp.float32)
    if squeeze_last:
        h = h[:, :, None]
    for w, b in zip(weights, biases):
        h = jnp.einsum("oi,bin->bon", w.astype(jnp.float32), h) + b[:, None]
        h = jnp.maximum(h, 0.0)
    if squeeze_last:
        h = h[:, :, 0]
    return h


# ---------------------------------------------------------------------------
# Deterministic init matching torch: xavier_normal_ weights (gain=1),
# Conv1d default uniform bias in [-1/sqrt(fan_in), 1/sqrt(fan_in)].
# Weights are stored in torch layout (Cout, Cin).
# ---------------------------------------------------------------------------
def init_mlp_params(key, nch_input, nch_layers):
    weights, biases = [], []
    last = nch_input
    for outp in nch_layers:
        key, kw, kb = jax.random.split(key, 3)
        std = (2.0 / (last + outp)) ** 0.5
        w = std * jax.random.normal(kw, (outp, last), jnp.float32)
        bound = 1.0 / (last ** 0.5)
        b = jax.random.uniform(kb, (outp,), jnp.float32, -bound, bound)
        weights.append(w)
        biases.append(b)
        last = outp
    return weights, biases


if __name__ == "__main__":
    key = jax.random.PRNGKey(0)
    k_x, k_x2, k_p = jax.random.split(key, 3)

    # Small shapes: batch=2, 16 input channels, 64 points, layers 32->64->128.
    B, Cin, N = 2, 16, 64
    nch_layers = (32, 64, 128)

    weights, biases = init_mlp_params(k_p, Cin, nch_layers)

    fwd = jax.jit(functools.partial(mlpnet_relu_forward,
                                    weights=weights, biases=biases))

    # [B, Cin, N] -> [B, Cout, N]
    x = jax.random.normal(k_x, (B, Cin, N), jnp.float32)
    out = fwd(x)
    jax.block_until_ready(out)
    assert out.shape == (B, nch_layers[-1], N), out.shape
    assert jnp.all(jnp.isfinite(out))
    assert jnp.all(out >= 0.0)                      # final ReLU
    ref = mlpnet_relu_reference(x, weights, biases)
    assert jnp.allclose(out, ref, rtol=5e-2, atol=1e-1), (
        float(jnp.max(jnp.abs(out - ref))))

    # [B, Cin] -> [B, Cout] path also supported by the module.
    x2 = jax.random.normal(k_x2, (B, Cin), jnp.float32)
    out2 = fwd(x2)
    jax.block_until_ready(out2)
    assert out2.shape == (B, nch_layers[-1]), out2.shape
    assert jnp.all(jnp.isfinite(out2))
    ref2 = mlpnet_relu_reference(x2, weights, biases)
    assert jnp.allclose(out2, ref2, rtol=5e-2, atol=1e-1), (
        float(jnp.max(jnp.abs(out2 - ref2))))

    print("KERNEL_OK")
</pallas_src>

<mosaic_0001>
module attributes {stable_mosaic.version = 11 : i64} {
  func.func @_mlp_kernel(%arg0: i32, %arg1: i32, %arg2: memref<1x16x128xbf16, #tpu.memory_space<vmem>>, %arg3: memref<32x16xbf16, #tpu.memory_space<vmem>>, %arg4: memref<32x1xf32, #tpu.memory_space<vmem>>, %arg5: memref<64x32xbf16, #tpu.memory_space<vmem>>, %arg6: memref<64x1xf32, #tpu.memory_space<vmem>>, %arg7: memref<128x64xbf16, #tpu.memory_space<vmem>>, %arg8: memref<128x1xf32, #tpu.memory_space<vmem>>, %arg9: memref<1x128x128xf32, #tpu.memory_space<vmem>>) attributes {dimension_semantics = [#tpu.dimension_semantics<parallel>, #tpu.dimension_semantics<parallel>], iteration_bounds = array<i64: 2, 1>, scalar_prefetch = 0 : i64, scratch_operands = 0 : i64, tpu.core_type = #tpu.core_type<tc>, window_params = [{transform_indices = @transform_0, window_bounds = array<i64: 1, 16, 128>}, {pipeline_mode = #tpu.pipeline_mode<synchronous>, transform_indices = @transform_1, window_bounds = array<i64: 32, 16>}, {pipeline_mode = #tpu.pipeline_mode<synchronous>, transform_indices = @transform_2, window_bounds = array<i64: 32, 1>}, {pipeline_mode = #tpu.pipeline_mode<synchronous>, transform_indices = @transform_3, window_bounds = array<i64: 64, 32>}, {pipeline_mode = #tpu.pipeline_mode<synchronous>, transform_indices = @transform_4, window_bounds = array<i64: 64, 1>}, {pipeline_mode = #tpu.pipeline_mode<synchronous>, transform_indices = @transform_5, window_bounds = array<i64: 128, 64>}, {pipeline_mode = #tpu.pipeline_mode<synchronous>, transform_indices = @transform_6, window_bounds = array<i64: 128, 1>}, {transform_indices = @transform_7, window_bounds = array<i64: 1, 128, 128>}]} {
    %c0 = arith.constant 0 : index
    %c0_0 = arith.constant 0 : index
    %c0_1 = arith.constant 0 : index
    %0 = vector.load %arg2[%c0, %c0_0, %c0_1] : memref<1x16x128xbf16, #tpu.memory_space<vmem>>, vector<1x16x128xbf16>
    %1 = vector.shape_cast %0 : vector<1x16x128xbf16> to vector<16x128xbf16>
    %c0_2 = arith.constant 0 : index
    %c0_3 = arith.constant 0 : index
    %2 = vector.load %arg3[%c0_2, %c0_3] : memref<32x16xbf16, #tpu.memory_space<vmem>>, vector<32x16xbf16>
    %cst = arith.constant dense<0.000000e+00> : vector<32x128xf32>
    %3 = tpu.matmul %2, %1, %cst {dimension_numbers = #tpu.dot_dimension_numbers<[1], [0], [0], [1], [0, 0, 1, 1], [], []>} : vector<32x16xbf16>, vector<16x128xbf16>, vector<32x128xf32> -> vector<32x128xf32>
    %c0_4 = arith.constant 0 : index
    %c0_5 = arith.constant 0 : index
    %4 = vector.load %arg4[%c0_4, %c0_5] : memref<32x1xf32, #tpu.memory_space<vmem>>, vector<32x1xf32>
    %5 = vector.broadcast %4 : vector<32x1xf32> to vector<32x128xf32>
    %6 = arith.addf %3, %5 : vector<32x128xf32>
    %cst_6 = arith.constant 0.000000e+00 : f32
    %7 = vector.broadcast %cst_6 : f32 to vector<32x128xf32>
    %8 = arith.maximumf %6, %7 : vector<32x128xf32>
    %9 = arith.truncf %8 : vector<32x128xf32> to vector<32x128xbf16>
    %c0_7 = arith.constant 0 : index
    %c0_8 = arith.constant 0 : index
    %10 = vector.load %arg5[%c0_7, %c0_8] : memref<64x32xbf16, #tpu.memory_space<vmem>>, vector<64x32xbf16>
    %cst_9 = arith.constant dense<0.000000e+00> : vector<64x128xf32>
    %11 = tpu.matmul %10, %9, %cst_9 {dimension_numbers = #tpu.dot_dimension_numbers<[1], [0], [0], [1], [0, 0, 1, 1], [], []>} : vector<64x32xbf16>, vector<32x128xbf16>, vector<64x128xf32> -> vector<64x128xf32>
    %c0_10 = arith.constant 0 : index
    %c0_11 = arith.constant 0 : index
    %12 = vector.load %arg6[%c0_10, %c0_11] : memref<64x1xf32, #tpu.memory_space<vmem>>, vector<64x1xf32>
    %13 = vector.broadcast %12 : vector<64x1xf32> to vector<64x128xf32>
    %14 = arith.addf %11, %13 : vector<64x128xf32>
    %cst_12 = arith.constant 0.000000e+00 : f32
    %15 = vector.broadcast %cst_12 : f32 to vector<64x128xf32>
    %16 = arith.maximumf %14, %15 : vector<64x128xf32>
    %17 = arith.truncf %16 : vector<64x128xf32> to vector<64x128xbf16>
    %c0_13 = arith.constant 0 : index
    %c0_14 = arith.constant 0 : index
    %18 = vector.load %arg7[%c0_13, %c0_14] : memref<128x64xbf16, #tpu.memory_space<vmem>>, vector<128x64xbf16>
    %cst_15 = arith.constant dense<0.000000e+00> : vector<128x128xf32>
    %19 = tpu.matmul %18, %17, %cst_15 {dimension_numbers = #tpu.dot_dimension_numbers<[1], [0], [0], [1], [0, 0, 1, 1], [], []>} : vector<128x64xbf16>, vector<64x128xbf16>, vector<128x128xf32> -> vector<128x128xf32>
    %c0_16 = arith.constant 0 : index
    %c0_17 = arith.constant 0 : index
    %20 = vector.load %arg8[%c0_16, %c0_17] : memref<128x1xf32, #tpu.memory_space<vmem>>, vector<128x1xf32>
    %21 = vector.broadcast %20 : vector<128x1xf32> to vector<128x128xf32>
    %22 = arith.addf %19, %21 : vector<128x128xf32>
    %cst_18 = arith.constant 0.000000e+00 : f32
    %23 = vector.broadcast %cst_18 : f32 to vector<128x128xf32>
    %24 = arith.maximumf %22, %23 : vector<128x128xf32>
    %c0_19 = arith.constant 0 : index
    %c0_20 = arith.constant 0 : index
    %c0_21 = arith.constant 0 : index
    %25 = vector.load %arg9[%c0_19, %c0_20, %c0_21] : memref<1x128x128xf32, #tpu.memory_space<vmem>>, vector<1x128x128xf32>
    %26 = vector.shape_cast %25 : vector<1x128x128xf32> to vector<128x128xf32>
    %27 = vector.shape_cast %24 : vector<128x128xf32> to vector<1x128x128xf32>
    tpu.vector_store %arg9[%c0_19, %c0_20, %c0_21], %27 {strides = array<i32>} : memref<1x128x128xf32, #tpu.memory_space<vmem>>, vector<1x128x128xf32>,
    return
  }
  func.func @transform_0(%arg0: i32, %arg1: i32) -> (i32, i32, i32) {
    %c0_i32 = arith.constant 0 : i32
    %c0_i32_0 = arith.constant 0 : i32
    return %arg0, %c0_i32, %arg1 : i32, i32, i32
  }
  func.func @transform_1(%arg0: i32, %arg1: i32) -> (i32, i32) {
    %c0_i32 = arith.constant 0 : i32
    %c0_i32_0 = arith.constant 0 : i32
    %c0_i32_1 = arith.constant 0 : i32
    return %c0_i32, %c0_i32_0 : i32, i32
  }
  func.func @transform_2(%arg0: i32, %arg1: i32) -> (i32, i32) {
    %c0_i32 = arith.constant 0 : i32
    %c0_i32_0 = arith.constant 0 : i32
    %c0_i32_1 = arith.constant 0 : i32
    return %c0_i32, %c0_i32_0 : i32, i32
  }
  func.func @transform_3(%arg0: i32, %arg1: i32) -> (i32, i32) {
    %c0_i32 = arith.constant 0 : i32
    %c0_i32_0 = arith.constant 0 : i32
    %c0_i32_1 = arith.constant 0 : i32
    return %c0_i32, %c0_i32_0 : i32, i32
  }
  func.func @transform_4(%arg0: i32, %arg1: i32) -> (i32, i32) {
    %c0_i32 = arith.constant 0 : i32
    %c0_i32_0 = arith.constant 0 : i32
    %c0_i32_1 = arith.constant 0 : i32
    return %c0_i32, %c0_i32_0 : i32, i32
  }
  func.func @transform_5(%arg0: i32, %arg1: i32) -> (i32, i32) {
    %c0_i32 = arith.constant 0 : i32
    %c0_i32_0 = arith.constant 0 : i32
    %c0_i32_1 = arith.constant 0 : i32
    return %c0_i32, %c0_i32_0 : i32, i32
  }
  func.func @transform_6(%arg0: i32, %arg1: i32) -> (i32, i32) {
    %c0_i32 = arith.constant 0 : i32
    %c0_i32_0 = arith.constant 0 : i32
    %c0_i32_1 = arith.constant 0 : i32
    return %c0_i32, %c0_i32_0 : i32, i32
  }
  func.func @transform_7(%arg0: i32, %arg1: i32) -> (i32, i32, i32) {
    %c0_i32 = arith.constant 0 : i32
    %c0_i32_0 = arith.constant 0 : i32
    return %arg0, %c0_i32, %arg1 : i32, i32, i32
  }
}

</mosaic_0001>

<llo_original>
// kernel: mlpnet_relu_forward.1
$region0: #{mlpnet_relu_forward.1}
  #allocation0 [shape = 'u32[]', space=smem, size = 0x4, offset = 0x4, fixed_abs, tag = 'smem constant byte address 0x4 - core index']
  #allocation1 [shape = 'u32[144,128]{1,0:T(1,128)}', space=vmem, size = 0x12000, scoped, tag = 'internal scratch']
  %s0 = inlined_call_operand.vmem [shape: bf16[2,16,128], index: 0, kind: input, shape index: {}]
  %s1 = inlined_call_operand.vmem [shape: bf16[32,16], index: 1, kind: input, shape index: {}]
  %s2 = inlined_call_operand.hbm [shape: f32[32,1], index: 2, kind: input, shape index: {}]
  %s3 = inlined_call_operand.hbm [shape: bf16[64,32], index: 3, kind: input, shape index: {}]
  %s4 = inlined_call_operand.vmem [shape: f32[64,1], index: 4, kind: input, shape index: {}]
  %s5 = inlined_call_operand.hbm [shape: bf16[128,64], index: 5, kind: input, shape index: {}]
  %s6 = inlined_call_operand.hbm [shape: f32[128,1], index: 6, kind: input, shape index: {}]
  %s7 = inlined_call_operand.vmem [shape: f32[2,128,128], index: 7, kind: output, shape index: {}]
  %s8 = sld [smem:[#allocation0]]
  $region77: #{mlpnet_relu_forward.1} parent=0
    _
  %s10 = ssub.s32 1, %s8
  %s11 = scalar_select 0, %s10, %s8
  $region1: #{mlpnet_relu_forward.1} parent=0
    #allocation2 [shape = 'u8[16384]{0}', space=vmem, size = 0x4000, scoped, tag = 'input window, operand 2, single buffered']
    #allocation3 [shape = 's32[2]{0}', space=sflag, size = 0x8, scoped, tag = 'scoped memory for mlpnet_relu_forward.1']
    #allocation4 [shape = 'u8[16384]{0}', space=vmem, size = 0x4000, scoped, tag = 'input window, operand 3, single buffered']
    #allocation5 [shape = 's32[1]{0}', space=sflag, size = 0x4, scoped, tag = 'scoped memory for mlpnet_relu_forward.1']
    #allocation6 [shape = 'u8[32768]{0}', space=vmem, size = 0x8000, scoped, tag = 'input window, operand 5, single buffered']
    #allocation7 [shape = 'u8[65536]{0}', space=vmem, size = 0x10000, scoped, tag = 'input window, operand 6, single buffered']
    #allocation8 [shape = 's32[1]{0}', space=sflag, size = 0x4, scoped, tag = 'scoped memory for mlpnet_relu_forward.1']
    %12 = vsyncpa [#allocation3], 0
    %13 = vsyncpa [#allocation5], 0
    %14 = vsyncpa [#allocation8], 0
    loop: start=0, step=1, limit=4
    $region2: #{mlpnet_relu_forward.1} parent=1 // loop_pre_header
      _
    $region3: #{mlpnet_relu_forward.1} parent=1 // loop_header
      %s16 = sphi 0, %s20
      %p17 = scmp.ge.s32.totalorder %s16, 4
      %s23 = sphi 0, %s35
      %s24 = sphi 0, %s31
      %s25 = sphi 0, %s23
      %s26 = sphi 0, %s24
      %s27 = sphi 0, %s25
      %s28 = sphi 0, %s26
      %s40 = sphi 0, %s42
      %s43 = sphi 0, %s40
      %s44 = sphi 0, %s43
      %s60 = sphi 0, %s44
      %s64 = sphi 0, %s64
      %s66 = sphi 0, %s64
      %s67 = sphi 0, %s66
      %s81 = sphi 0, %s67
      %s85 = sphi 0, %s85
      %s87 = sphi 0, %s85
      %s88 = sphi 0, %s87
      %s102 = sphi 0, %s88
      %s106 = sphi 0, %s106
      %s108 = sphi 0, %s106
      %s109 = sphi 0, %s108
      %s123 = sphi 0, %s109
      %s127 = sphi 0, %s127
      %s129 = sphi 0, %s127
      %s130 = sphi 0, %s129
      %s144 = sphi 0, %s130
      %s148 = sphi 0, %s148
      %s150 = sphi 0, %s148
      %s151 = sphi 0, %s150
      %s165 = sphi 0, %s151
      %s169 = sphi 0, %s169
      %s171 = sphi 0, %s169
      %s172 = sphi 0, %s171
      %s186 = sphi 0, %s172
      %s194 = sphi 0, %s196
      %s197 = sphi 0, %s194
      %s198 = sphi 0, %s197
      %s214 = sphi 0, %s198
    $region4: #{mlpnet_relu_forward.1} parent=1 // loop_header_branch
      %19 = sbr.rel (%p17) target = $region8
    $region5: #{mlpnet_relu_forward.1} parent=1 // loop_body
      %s21 = ssub.s32 %s16, 1
      %s22 = ssub.s32 %s16, 2
      %s29 = sadd.s32 1, %s24
      %p30 = scmp.ge.s32.totalorder %s29, 1
      %s31 = scalar_select %p30, 0, %s29
      %s32 = sadd.s32 1, %s23
      %s33 = scalar_select %p30, %s32, %s23
      %p34 = scmp.ge.s32.totalorder %s33, 2
      %s35 = scalar_select %p34, 0, %s33
      %s36 = ssub.s32 %s23, %s35
      %s37 = ssub.s32 %s24, %s31
      %s38 = sor.u32 %s36, %s37
      %p39 = scmp.eq.s32.totalorder %s38, 0
      %s41 = sadd.s32 %s40, 1
      %s42 = scalar_select %p39, %s40, %s41
      %p45 = pneg %p39
      %p46 = scmp.eq.s32.totalorder %s16, 1
      %p47 = por %p45, %p46
      %p48 = scmp.ne.s32.totalorder %s40, %s43
      %p49 = scmp.eq.s32.totalorder %s16, 0
      %p50 = por %p48, %p49
      %p51 = scmp.ne.s32.totalorder %s40, %s43
      %p52 = scmp.eq.s32.totalorder %s21, 1
      %p53 = por %p51, %p52
      %p54 = scmp.ne.s32.totalorder %s43, %s44
      %p55 = scmp.eq.s32.totalorder %s21, 0
      %p56 = por %p54, %p55
      %p57 = scmp.ne.s32.totalorder %s43, %s44
      %p58 = scmp.eq.s32.totalorder %s22, 1
      %p59 = por %p57, %p58
      %p61 = scmp.ne.s32.totalorder %s44, %s60
      %p62 = scmp.eq.s32.totalorder %s22, 0
      %p63 = por %p61, %p62
      %s65 = sadd.s32 %s64, 1
      %p68 = scmp.eq.s32.totalorder %s16, 1
      %p69 = scmp.ne.s32.totalorder %s64, %s66
      %p70 = scmp.eq.s32.totalorder %s16, 0
      %p71 = por %p69, %p70
      %p72 = scmp.ne.s32.totalorder %s64, %s66
      %p73 = scmp.eq.s32.totalorder %s21, 1
      %p74 = por %p72, %p73
      %p75 = scmp.ne.s32.totalorder %s66, %s67
      %p76 = scmp.eq.s32.totalorder %s21, 0
      %p77 = por %p75, %p76
      %p78 = scmp.ne.s32.totalorder %s66, %s67
      %p79 = scmp.eq.s32.totalorder %s22, 1
      %p80 = por %p78, %p79
      %p82 = scmp.ne.s32.totalorder %s67, %s81
      %p83 = scmp.eq.s32.totalorder %s22, 0
      %p84 = por %p82, %p83
      %s86 = sadd.s32 %s85, 1
      %p89 = scmp.eq.s32.totalorder %s16, 1
      %p90 = scmp.ne.s32.totalorder %s85, %s87
      %p91 = scmp.eq.s32.totalorder %s16, 0
      %p92 = por %p90, %p91
      %p93 = scmp.ne.s32.totalorder %s85, %s87
      %p94 = scmp.eq.s32.totalorder %s21, 1
      %p95 = por %p93, %p94
      %p96 = scmp.ne.s32.totalorder %s87, %s88
      %p97 = scmp.eq.s32.totalorder %s21, 0
      %p98 = por %p96, %p97
      %p99 = scmp.ne.s32.totalorder %s87, %s88
      %p100 = scmp.eq.s32.totalorder %s22, 1
      %p101 = por %p99, %p100
      %p103 = scmp.ne.s32.totalorder %s88, %s102
      %p104 = scmp.eq.s32.totalorder %s22, 0
      %p105 = por %p103, %p104
      %s107 = sadd.s32 %s106, 1
      %p110 = scmp.eq.s32.totalorder %s16, 1
      %p111 = scmp.ne.s32.totalorder %s106, %s108
      %p112 = scmp.eq.s32.totalorder %s16, 0
      %p113 = por %p111, %p112
      %p114 = scmp.ne.s32.totalorder %s106, %s108
      %p115 = scmp.eq.s32.totalorder %s21, 1
      %p116 = por %p114, %p115
      %p117 = scmp.ne.s32.totalorder %s108, %s109
      %p118 = scmp.eq.s32.totalorder %s21, 0
      %p119 = por %p117, %p118
      %p120 = scmp.ne.s32.totalorder %s108, %s109
      %p121 = scmp.eq.s32.totalorder %s22, 1
      %p122 = por %p120, %p121
      %p124 = scmp.ne.s32.totalorder %s109, %s123
      %p125 = scmp.eq.s32.totalorder %s22, 0
      %p126 = por %p124, %p125
      %s128 = sadd.s32 %s127, 1
      %p131 = scmp.eq.s32.totalorder %s16, 1
      %p132 = scmp.ne.s32.totalorder %s127, %s129
      %p133 = scmp.eq.s32.totalorder %s16, 0
      %p134 = por %p132, %p133
      %p135 = scmp.ne.s32.totalorder %s127, %s129
      %p136 = scmp.eq.s32.totalorder %s21, 1
      %p137 = por %p135, %p136
      %p138 = scmp.ne.s32.totalorder %s129, %s130
      %p139 = scmp.eq.s32.totalorder %s21, 0
      %p140 = por %p138, %p139
      %p141 = scmp.ne.s32.totalorder %s129, %s130
      %p142 = scmp.eq.s32.totalorder %s22, 1
      %p143 = por %p141, %p142
      %p145 = scmp.ne.s32.totalorder %s130, %s144
      %p146 = scmp.eq.s32.totalorder %s22, 0
      %p147 = por %p145, %p146
      %s149 = sadd.s32 %s148, 1
      %p152 = scmp.eq.s32.totalorder %s16, 1
      %p153 = scmp.ne.s32.totalorder %s148, %s150
      %p154 = scmp.eq.s32.totalorder %s16, 0
      %p155 = por %p153, %p154
      %p156 = scmp.ne.s32.totalorder %s148, %s150
      %p157 = scmp.eq.s32.totalorder %s21, 1
      %p158 = por %p156, %p157
      %p159 = scmp.ne.s32.totalorder %s150, %s151
      %p160 = scmp.eq.s32.totalorder %s21, 0
      %p161 = por %p159, %p160
      %p162 = scmp.ne.s32.totalorder %s150, %s151
      %p163 = scmp.eq.s32.totalorder %s22, 1
      %p164 = por %p162, %p163
      %p166 = scmp.ne.s32.totalorder %s151, %s165
      %p167 = scmp.eq.s32.totalorder %s22, 0
      %p168 = por %p166, %p167
      %s170 = sadd.s32 %s169, 1
      %p173 = scmp.eq.s32.totalorder %s16, 1
      %p174 = scmp.ne.s32.totalorder %s169, %s171
      %p175 = scmp.eq.s32.totalorder %s16, 0
      %p176 = por %p174, %p175
      %p177 = scmp.ne.s32.totalorder %s169, %s171
      %p178 = scmp.eq.s32.totalorder %s21, 1
      %p179 = por %p177, %p178
      %p180 = scmp.ne.s32.totalorder %s171, %s172
      %p181 = scmp.eq.s32.totalorder %s21, 0
      %p182 = por %p180, %p181
      %p183 = scmp.ne.s32.totalorder %s171, %s172
      %p184 = scmp.eq.s32.totalorder %s22, 1
      %p185 = por %p183, %p184
      %p187 = scmp.ne.s32.totalorder %s172, %s186
      %p188 = scmp.eq.s32.totalorder %s22, 0
      %p189 = por %p187, %p188
      %s190 = ssub.s32 %s23, %s35
      %s191 = ssub.s32 %s24, %s31
      %s192 = sor.u32 %s190, %s191
      %p193 = scmp.eq.s32.totalorder %s192, 0
      %s195 = sadd.s32 %s194, 1
      %s196 = scalar_select %p193, %s194, %s195
      %p199 = pneg %p193
      %p200 = scmp.eq.s32.totalorder %s16, 1
      %p201 = por %p199, %p200
      %p202 = scmp.ne.s32.totalorder %s194, %s197
      %p203 = scmp.eq.s32.totalorder %s16, 0
      %p204 = por %p202, %p203
      %p205 = scmp.ne.s32.totalorder %s194, %s197
      %p206 = scmp.eq.s32.totalorder %s21, 1
      %p207 = por %p205, %p206
      %p208 = scmp.ne.s32.totalorder %s197, %s198
      %p209 = scmp.eq.s32.totalorder %s21, 0
      %p210 = por %p208, %p209
      %p211 = scmp.ne.s32.totalorder %s197, %s198
      %p212 = scmp.eq.s32.totalorder %s22, 1
      %p213 = por %p211, %p212
      %p215 = scmp.ne.s32.totalorder %s198, %s214
      %p216 = scmp.eq.s32.totalorder %s22, 0
      %p217 = por %p215, %p216
      %p218 = scmp.le.s32.totalorder 1, %s16
      %p219 = scmp.lt.s32.totalorder %s16, 3
      %p220 = pnand %p218, %p219
      %p221 = pneg %p220
      // Predicated region
      $region9: #{mlpnet_relu_forward.1} parent=5 // pred_check
        _
      $region10: #{mlpnet_relu_forward.1} parent=5 // pred_check_branch
        %223 = sbr.rel (%p220) target = $region12
      $region11: #{mlpnet_relu_forward.1} parent=5 // pred_region
        %s224 = ssub.s32 %s16, 1
        // Predicated region
        $region13: #{mlpnet_relu_forward.1} parent=11 // pred_check
          %p225 = pneg %p77
        $region14: #{mlpnet_relu_forward.1} parent=11 // pred_check_branch
          %227 = sbr.rel (%p225) target = $region16
        $region15: #{mlpnet_relu_forward.1} parent=11 // pred_region
          _
        $region16: #{mlpnet_relu_forward.1} parent=11 // pred_fallthru
          _
        // Predicated region
        $region17: #{mlpnet_relu_forward.1} parent=11 // pred_check
          %p228 = pneg %p98
        $region18: #{mlpnet_relu_forward.1} parent=11 // pred_check_branch
          %230 = sbr.rel (%p228) target = $region20
        $region19: #{mlpnet_relu_forward.1} parent=11 // pred_region
          %s232 = ssub.s32 512, 512
          %233 = vsyncadd [#allocation3], %s232
          %s234 = sshll.u32 [#allocation2], 4
          %s235 = int_to_ptr.vmem [resolvable:$true] %s234
          %240 = dma.hbm_to_vmem [thread:$0]  %s2, 512, %s235, [#allocation3], 128, 128, 8
        $region20: #{mlpnet_relu_forward.1} parent=11 // pred_fallthru
          _
        // Predicated region
        $region21: #{mlpnet_relu_forward.1} parent=11 // pred_check
          %p241 = pneg %p119
        $region22: #{mlpnet_relu_forward.1} parent=11 // pred_check_branch
          %243 = sbr.rel (%p241) target = $region24
        $region23: #{mlpnet_relu_forward.1} parent=11 // pred_region
          %s245 = ssub.s32 512, 512
          %246 = vsyncadd [#allocation5], %s245
          %s247 = sshll.u32 [#allocation4], 4
          %s248 = int_to_ptr.vmem [resolvable:$true] %s247
          %253 = dma.hbm_to_vmem [thread:$0]  %s3, 512, %s248, [#allocation5], 64, 64, 4
        $region24: #{mlpnet_relu_forward.1} parent=11 // pred_fallthru
          _
        // Predicated region
        $region25: #{mlpnet_relu_forward.1} parent=11 // pred_check
          %p254 = pneg %p140
        $region26: #{mlpnet_relu_forward.1} parent=11 // pred_check_branch
          %256 = sbr.rel (%p254) target = $region28
        $region27: #{mlpnet_relu_forward.1} parent=11 // pred_region
          _
        $region28: #{mlpnet_relu_forward.1} parent=11 // pred_fallthru
          _
        // Predicated region
        $region29: #{mlpnet_relu_forward.1} parent=11 // pred_check
          %p257 = pneg %p161
        $region30: #{mlpnet_relu_forward.1} parent=11 // pred_check_branch
          %259 = sbr.rel (%p257) target = $region32
        $region31: #{mlpnet_relu_forward.1} parent=11 // pred_region
          %s261 = ssub.s32 1024, 1024
          %262 = vsyncadd [#allocation5], %s261
          %s263 = sshll.u32 [#allocation6], 4
          %s264 = int_to_ptr.vmem [resolvable:$true] %s263
          %269 = dma.hbm_to_vmem [thread:$0]  %s5, 1024, %s264, [#allocation5], 64, 64, 4
        $region32: #{mlpnet_relu_forward.1} parent=11 // pred_fallthru
          _
        // Predicated region
        $region33: #{mlpnet_relu_forward.1} parent=11 // pred_check
          %p270 = pneg %p182
        $region34: #{mlpnet_relu_forward.1} parent=11 // pred_check_branch
          %272 = sbr.rel (%p270) target = $region36
        $region35: #{mlpnet_relu_forward.1} parent=11 // pred_region
          %s274 = ssub.s32 2048, 2048
          %275 = vsyncadd [#allocation8], %s274
          %s276 = sshll.u32 [#allocation7], 4
          %s277 = int_to_ptr.vmem [resolvable:$true] %s276
          %282 = dma.hbm_to_vmem [thread:$0]  %s6, 2048, %s277, [#allocation8], 128, 128, 8
        $region36: #{mlpnet_relu_forward.1} parent=11 // pred_fallthru
          _
      $region12: #{mlpnet_relu_forward.1} parent=5 // pred_fallthru
        _
      %p283 = scmp.lt.s32.totalorder %s16, 2
      // Predicated region
      $region37: #{mlpnet_relu_forward.1} parent=5 // pred_check
        %p284 = pneg %p283
      $region38: #{mlpnet_relu_forward.1} parent=5 // pred_check_branch
        %286 = sbr.rel (%p284) target = $region40
      $region39: #{mlpnet_relu_forward.1} parent=5 // pred_region
        // Predicated region
        $region41: #{mlpnet_relu_forward.1} parent=39 // pred_check
          %p287 = pneg %p50
        $region42: #{mlpnet_relu_forward.1} parent=39 // pred_check_branch
          %289 = sbr.rel (%p287) target = $region44
        $region43: #{mlpnet_relu_forward.1} parent=39 // pred_region
          %p290 = scmp.lt.s32.totalorder %s23, 1
          %s291 = scalar_select %p290, %s23, 1
          %p292 = scmp.lt.s32.totalorder %s24, 0
          %s293 = scalar_select %p292, %s24, 0
          %s294 = smul.addr %s291, 2
          %s295 = sadd.s32 %s293, %s294
          %s296 = smul.addr %s295, 4
          %s297 = scalar_lea.vmem %s0, %s296
        $region44: #{mlpnet_relu_forward.1} parent=39 // pred_fallthru
          _
      $region40: #{mlpnet_relu_forward.1} parent=5 // pred_fallthru
        _
      %p298 = scmp.le.s32.totalorder 1, %s16
      %p299 = scmp.lt.s32.totalorder %s16, 3
      %p300 = pnand %p298, %p299
      %p301 = pneg %p300
      // Predicated region
      $region45: #{mlpnet_relu_forward.1} parent=5 // pred_check
        _
      $region46: #{mlpnet_relu_forward.1} parent=5 // pred_check_branch
        %303 = sbr.rel (%p300) target = $region48
      $region47: #{mlpnet_relu_forward.1} parent=5 // pred_region
        %s304 = ssub.s32 %s16, 1
        // Predicated region
        $region49: #{mlpnet_relu_forward.1} parent=47 // pred_check
          %p305 = pneg %p98
        $region50: #{mlpnet_relu_forward.1} parent=47 // pred_check_branch
          %307 = sbr.rel (%p305) target = $region52
        $region51: #{mlpnet_relu_forward.1} parent=47 // pred_region
          %308 = dma.done [#allocation3], 512
        $region52: #{mlpnet_relu_forward.1} parent=47 // pred_fallthru
          _
        // Predicated region
        $region53: #{mlpnet_relu_forward.1} parent=47 // pred_check
          %p309 = pneg %p119
        $region54: #{mlpnet_relu_forward.1} parent=47 // pred_check_branch
          %311 = sbr.rel (%p309) target = $region56
        $region55: #{mlpnet_relu_forward.1} parent=47 // pred_region
          %312 = dma.done [#allocation5], 512
        $region56: #{mlpnet_relu_forward.1} parent=47 // pred_fallthru
          _
        // Predicated region
        $region57: #{mlpnet_relu_forward.1} parent=47 // pred_check
          %p313 = pneg %p161
        $region58: #{mlpnet_relu_forward.1} parent=47 // pred_check_branch
          %315 = sbr.rel (%p313) target = $region60
        $region59: #{mlpnet_relu_forward.1} parent=47 // pred_region
          %316 = dma.done [#allocation5], 1024
        $region60: #{mlpnet_relu_forward.1} parent=47 // pred_fallthru
          _
        // Predicated region
        $region61: #{mlpnet_relu_forward.1} parent=47 // pred_check
          %p317 = pneg %p182
        $region62: #{mlpnet_relu_forward.1} parent=47 // pred_check_branch
          %319 = sbr.rel (%p317) target = $region64
        $region63: #{mlpnet_relu_forward.1} parent=47 // pred_region
          %320 = dma.done [#allocation8], 2048
        $region64: #{mlpnet_relu_forward.1} parent=47 // pred_fallthru
          _
        %p321 = scmp.lt.s32.totalorder %s25, 1
        %s322 = scalar_select %p321, %s25, 1
        %p323 = scmp.lt.s32.totalorder %s26, 0
        %s324 = scalar_select %p323, %s26, 0
        %s325 = smul.addr %s322, 2
        %s326 = sadd.s32 %s324, %s325
        %s327 = smul.addr %s326, 4
        %s328 = scalar_lea.vmem %s0, %s327
        %p329 = pneg %p56
        %p330 = pneg %p53
        %p331 = pneg %p77
        %p332 = pneg %p74
        %p333 = pneg %p98
        %p334 = pneg %p95
        %p335 = pneg %p119
        %p336 = pneg %p116
        %p337 = pneg %p140
        %p338 = pneg %p137
        %p339 = pneg %p161
        %p340 = pneg %p158
        %p341 = pneg %p182
        %p342 = pneg %p179
        %p343 = pneg %p210
        %p344 = pneg %p207
        %p345 = scmp.lt.s32.totalorder %s25, 1
        %s346 = scalar_select %p345, %s25, 1
        %p347 = scmp.lt.s32.totalorder %s26, 0
        %s348 = scalar_select %p347, %s26, 0
        %s349 = smul.addr %s346, 16
        %s350 = sadd.s32 %s348, %s349
        %s351 = smul.addr %s350, 8
        %s352 = scalar_lea.vmem %s7, %s351
        %p353 = scmp.lt.s32.totalorder %s25, 1
        %s354 = scalar_select %p353, %s25, 1
        %p355 = scmp.lt.s32.totalorder %s26, 0
        %s356 = scalar_select %p355, %s26, 0
        %s357 = smul.addr %s354, 2
        %s358 = sadd.s32 %s356, %s357
        %s359 = smul.addr %s358, 4
        %s360 = scalar_lea.vmem %s0, %s359
        %p361 = scmp.lt.s32.totalorder %s25, 1
        %s362 = scalar_select %p361, %s25, 1
        %p363 = scmp.lt.s32.totalorder %s26, 0
        %s364 = scalar_select %p363, %s26, 0
        %s365 = smul.addr %s362, 16
        %s366 = sadd.s32 %s364, %s365
        %s367 = smul.addr %s366, 8
        %s368 = scalar_lea.vmem %s7, %s367
        %v370 = vld [vmem:[%s360] sm:$0xf]
        %v371 = vld [vmem:[%s360 + $0x4] sm:$0xf]
        %v372 = vld [vmem:[%s1] sm:$0xf]
        %v373 = vld [vmem:[%s1 + $0x4] sm:$0xf]
        %v374 = vld [vmem:[%s1 + $0x8] sm:$0xf]
        %v375 = vld [vmem:[%s1 + $0xc] sm:$0xf]
        %v376 = vld [vmem:[#allocation2] sm:$0xff]
        %v377 = vld [vmem:[#allocation2 + $0x8] sm:$0xff]
        %v378 = vld [vmem:[#allocation2 + $0x10] sm:$0xff]
        %v379 = vld [vmem:[#allocation2 + $0x18] sm:$0xff]
        %381 = vset.pattern.permute.xlu0 0
        %382 = vperm.xlu0 %381, %v376
        %v383 = vpop.permute.xlu0 %382
        %386 = vset.pattern.permute.xlu0 0
        %387 = vperm.xlu0 %386, %v377
        %v388 = vpop.permute.xlu0 %387
        %391 = vset.pattern.permute.xlu0 0
        %392 = vperm.xlu0 %391, %v378
        %v393 = vpop.permute.xlu0 %392
        %396 = vset.pattern.permute.xlu0 0
        %397 = vperm.xlu0 %396, %v379
        %v398 = vpop.permute.xlu0 %397
        %v404 = vunpack.c.l.b16 %v372
        %v405 = vunpack.c.l.b16 %v373
        %v406 = vunpack.c.l.b16 %v374
        %v407 = vunpack.c.l.b16 %v375
        %v408 = vpack.c.b16 %v405, %v404
        %v409 = vpack.c.b16 %v407, %v406
        %v412 = vunpack.c.l.b16 %v370
        %v413 = vunpack.c.l.b16 %v371
        %v414 = vpack.c.b16 %v413, %v412
        %vm416 = vcmask 130048
        %v418 = vsel %vm416, %v408, 0
        %v421 = vsel %vm416, %v409, 0
        %423 = vmatprep.subr.bf16.mxu0 0
        %424 = vmatpush1.bf16.msra.mxu0 0
        %425 = vmatprep.subr.bf16.mxu0 0
        %426 = vmatpush1.bf16.msra.mxu0 0
        %427 = vmatprep.subr.bf16.mxu0 0
        %428 = vmatpush1.bf16.msra.mxu0 0
        %429 = vmatprep.subr.bf16.mxu0 0
        %430 = vmatpush1.bf16.msra.mxu0 0
        %431 = vmatprep.subr.bf16.mxu0 0
        %432 = vmatpush1.bf16.msra.mxu0 0
        %433 = vmatprep.subr.bf16.mxu0 0
        %434 = vmatpush1.bf16.msra.mxu0 0
        %435 = vmatprep.subr.bf16.mxu0 0
        %436 = vmatpush1.bf16.msra.mxu0 0
        %437 = vmatprep.subr.bf16.mxu0 0
        %438 = vmatpush1.bf16.msra.mxu0 %v414
        %439 = vmatprep.subr.bf16.mxu0 0
        %440 = vmatpush2.bf16.msra.mxu0 0
        %441 = vmatprep.subr.bf16.mxu0 0
        %442 = vmatpush2.bf16.msra.mxu0 0
        %443 = vmatprep.subr.bf16.mxu0 0
        %444 = vmatpush2.bf16.msra.mxu0 0
        %445 = vmatprep.subr.bf16.mxu0 0
        %446 = vmatpush2.bf16.msra.mxu0 0
        %447 = vmatprep.subr.bf16.mxu0 0
        %448 = vmatpush2.bf16.msra.mxu0 0
        %449 = vmatprep.subr.bf16.mxu0 0
        %450 = vmatpush2.bf16.msra.mxu0 0
        %451 = vmatprep.subr.bf16.mxu0 0
        %452 = vmatpush2.bf16.msra.mxu0 0
        %453 = vmatprep.subr.bf16.mxu0 0
        %454 = vmatpush2.bf16.msra.mxu0 0
        %455 = vmatprep.mubr.bf16.mxu0 0
        %456 = vmatmul.mubr.bf16.gmra.mxu0 %v418
        %v457 = vpop.f32.mrf.mxu0
        %v458 = vadd.f32 %v383, %v457
        %v459 = vpop.f32.mrf.mxu0
        %v460 = vpop.f32.mrf.mxu0
        %v461 = vadd.f32 %v388, %v460
        %v462 = vpop.f32.mrf.mxu0
        %463 = vmatprep.mubr.bf16.mxu0 0
        %464 = vmatmul.mubr.bf16.gmra.mxu0 %v421
        %v465 = vpop.f32.mrf.mxu0
        %v466 = vadd.f32 %v393, %v465
        %v467 = vpop.f32.mrf.mxu0
        %v468 = vpop.f32.mrf.mxu0
        %v469 = vadd.f32 %v398, %v468
        %v470 = vpop.f32.mrf.mxu0
        %471 = vdwg.mxu0
        %v472 = vmax.f32 %v458, 0.0
        %v473 = vmax.f32 %v461, 0.0
        %v474 = vmax.f32 %v466, 0.0
        %v475 = vmax.f32 %v469, 0.0
        %v476 = vpack.c.bf16 %v473, %v472
        %v477 = vpack.c.bf16 %v475, %v474
        %v478 = vld [vmem:[#allocation4] sm:$0xf]
        %v479 = vld [vmem:[#allocation4 + $0x4] sm:$0xf]
        %v480 = vld [vmem:[#allocation4 + $0x8] sm:$0xf]
        %v481 = vld [vmem:[#allocation4 + $0xc] sm:$0xf]
        %v482 = vld [vmem:[#allocation4 + $0x10] sm:$0xf]
        %v483 = vld [vmem:[#allocation4 + $0x14] sm:$0xf]
        %v484 = vld [vmem:[#allocation4 + $0x18] sm:$0xf]
        %v485 = vld [vmem:[#allocation4 + $0x1c] sm:$0xf]
        %v486 = vld [vmem:[%s4] sm:$0xff]
        %v487 = vld [vmem:[%s4 + $0x8] sm:$0xff]
        %v488 = vld [vmem:[%s4 + $0x10] sm:$0xff]
        %v489 = vld [vmem:[%s4 + $0x18] sm:$0xff]
        %v490 = vld [vmem:[%s4 + $0x20] sm:$0xff]
        %v491 = vld [vmem:[%s4 + $0x28] sm:$0xff]
        %v492 = vld [vmem:[%s4 + $0x30] sm:$0xff]
        %v493 = vld [vmem:[%s4 + $0x38] sm:$0xff]
        %495 = vset.pattern.permute.xlu0 0
        %496 = vperm.xlu0 %495, %v486
        %v497 = vpop.permute.xlu0 %496
        %500 = vset.pattern.permute.xlu0 0
        %501 = vperm.xlu0 %500, %v487
        %v502 = vpop.permute.xlu0 %501
        %505 = vset.pattern.permute.xlu0 0
        %506 = vperm.xlu0 %505, %v488
        %v507 = vpop.permute.xlu0 %506
        %510 = vset.pattern.permute.xlu0 0
        %511 = vperm.xlu0 %510, %v489
        %v512 = vpop.permute.xlu0 %511
        %515 = vset.pattern.permute.xlu0 0
        %516 = vperm.xlu0 %515, %v490
        %v517 = vpop.permute.xlu0 %516
        %520 = vset.pattern.permute.xlu0 0
        %521 = vperm.xlu0 %520, %v491
        %v522 = vpop.permute.xlu0 %521
        %525 = vset.pattern.permute.xlu0 0
        %526 = vperm.xlu0 %525, %v492
        %v527 = vpop.permute.xlu0 %526
        %530 = vset.pattern.permute.xlu0 0
        %531 = vperm.xlu0 %530, %v493
        %v532 = vpop.permute.xlu0 %531
        %v542 = vunpack.c.l.b16 %v478
        %v543 = vunpack.c.l.b16 %v479
        %v544 = vunpack.c.l.b16 %v480
        %v545 = vunpack.c.l.b16 %v481
        %v546 = vunpack.c.l.b16 %v482
        %v547 = vunpack.c.l.b16 %v483
        %v548 = vunpack.c.l.b16 %v484
        %v549 = vunpack.c.l.b16 %v485
        %v550 = vpack.c.b16 %v543, %v542
        %v551 = vpack.c.b16 %v545, %v544
        %v552 = vpack.c.b16 %v547, %v546
        %v553 = vpack.c.b16 %v549, %v548
        %vm554 = vcmask 261120
        %v556 = vsel %vm554, %v550, 0
        %v559 = vsel %vm554, %v551, 0
        %v562 = vsel %vm554, %v552, 0
        %v565 = vsel %vm554, %v553, 0
        %567 = vmatprep.subr.bf16.mxu0 0
        %568 = vmatpush1.bf16.msra.mxu0 0
        %569 = vmatprep.subr.bf16.mxu0 0
        %570 = vmatpush1.bf16.msra.mxu0 0
        %571 = vmatprep.subr.bf16.mxu0 0
        %572 = vmatpush1.bf16.msra.mxu0 0
        %573 = vmatprep.subr.bf16.mxu0 0
        %574 = vmatpush1.bf16.msra.mxu0 0
        %575 = vmatprep.subr.bf16.mxu0 0
        %576 = vmatpush1.bf16.msra.mxu0 0
        %577 = vmatprep.subr.bf16.mxu0 0
        %578 = vmatpush1.bf16.msra.mxu0 0
        %579 = vmatprep.subr.bf16.mxu0 0
        %580 = vmatpush1.bf16.msra.mxu0 %v477
        %581 = vmatprep.subr.bf16.mxu0 0
        %582 = vmatpush1.bf16.msra.mxu0 %v476
        %583 = vmatprep.subr.bf16.mxu0 0
        %584 = vmatpush2.bf16.msra.mxu0 0
        %585 = vmatprep.subr.bf16.mxu0 0
        %586 = vmatpush2.bf16.msra.mxu0 0
        %587 = vmatprep.subr.bf16.mxu0 0
        %588 = vmatpush2.bf16.msra.mxu0 0
        %589 = vmatprep.subr.bf16.mxu0 0
        %590 = vmatpush2.bf16.msra.mxu0 0
        %591 = vmatprep.subr.bf16.mxu0 0
        %592 = vmatpush2.bf16.msra.mxu0 0
        %593 = vmatprep.subr.bf16.mxu0 0
        %594 = vmatpush2.bf16.msra.mxu0 0
        %595 = vmatprep.subr.bf16.mxu0 0
        %596 = vmatpush2.bf16.msra.mxu0 0
        %597 = vmatprep.subr.bf16.mxu0 0
        %598 = vmatpush2.bf16.msra.mxu0 0
        %599 = vmatprep.mubr.bf16.mxu0 0
        %600 = vmatmul.mubr.bf16.gmra.mxu0 %v556
        %v601 = vpop.f32.mrf.mxu0
        %v602 = vadd.f32 %v497, %v601
        %v603 = vpop.f32.mrf.mxu0
        %v604 = vpop.f32.mrf.mxu0
        %v605 = vadd.f32 %v502, %v604
        %v606 = vpop.f32.mrf.mxu0
        %607 = vmatprep.mubr.bf16.mxu0 0
        %608 = vmatmul.mubr.bf16.gmra.mxu0 %v559
        %v609 = vpop.f32.mrf.mxu0
        %v610 = vadd.f32 %v507, %v609
        %v611 = vpop.f32.mrf.mxu0
        %v612 = vpop.f32.mrf.mxu0
        %v613 = vadd.f32 %v512, %v612
        %v614 = vpop.f32.mrf.mxu0
        %615 = vmatprep.mubr.bf16.mxu0 0
        %616 = vmatmul.mubr.bf16.gmra.mxu0 %v562
        %v617 = vpop.f32.mrf.mxu0
        %v618 = vadd.f32 %v517, %v617
        %v619 = vpop.f32.mrf.mxu0
        %v620 = vpop.f32.mrf.mxu0
        %v621 = vadd.f32 %v522, %v620
        %v622 = vpop.f32.mrf.mxu0
        %623 = vmatprep.mubr.bf16.mxu0 0
        %624 = vmatmul.mubr.bf16.gmra.mxu0 %v565
        %v625 = vpop.f32.mrf.mxu0
        %v626 = vadd.f32 %v527, %v625
        %v627 = vpop.f32.mrf.mxu0
        %v628 = vpop.f32.mrf.mxu0
        %v629 = vadd.f32 %v532, %v628
        %v630 = vpop.f32.mrf.mxu0
        %631 = vdwg.mxu0
        %v632 = vmax.f32 %v602, 0.0
        %v633 = vmax.f32 %v605, 0.0
        %v634 = vmax.f32 %v610, 0.0
        %v635 = vmax.f32 %v613, 0.0
        %v636 = vmax.f32 %v618, 0.0
        %v637 = vmax.f32 %v621, 0.0
        %v638 = vmax.f32 %v626, 0.0
        %v639 = vmax.f32 %v629, 0.0
        %v640 = vpack.c.bf16 %v633, %v632
        %v641 = vpack.c.bf16 %v635, %v634
        %v642 = vpack.c.bf16 %v637, %v636
        %v643 = vpack.c.bf16 %v639, %v638
        %v644 = vld [vmem:[#allocation6] sm:$0xf]
        %v645 = vld [vmem:[#allocation6 + $0x4] sm:$0xf]
        %v646 = vld [vmem:[#allocation6 + $0x8] sm:$0xf]
        %v647 = vld [vmem:[#allocation6 + $0xc] sm:$0xf]
        %v648 = vld [vmem:[#allocation6 + $0x10] sm:$0xf]
        %v649 = vld [vmem:[#allocation6 + $0x14] sm:$0xf]
        %v650 = vld [vmem:[#allocation6 + $0x18] sm:$0xf]
        %v651 = vld [vmem:[#allocation6 + $0x1c] sm:$0xf]
        %v652 = vld [vmem:[#allocation6 + $0x20] sm:$0xf]
        %v653 = vld [vmem:[#allocation6 + $0x24] sm:$0xf]
        %v654 = vld [vmem:[#allocation6 + $0x28] sm:$0xf]
        %v655 = vld [vmem:[#allocation6 + $0x2c] sm:$0xf]
        %v656 = vld [vmem:[#allocation6 + $0x30] sm:$0xf]
        %v657 = vld [vmem:[#allocation6 + $0x34] sm:$0xf]
        %v658 = vld [vmem:[#allocation6 + $0x38] sm:$0xf]
        %v659 = vld [vmem:[#allocation6 + $0x3c] sm:$0xf]
        %v660 = vld [vmem:[#allocation7] sm:$0xff]
        %v661 = vld [vmem:[#allocation7 + $0x8] sm:$0xff]
        %v662 = vld [vmem:[#allocation7 + $0x10] sm:$0xff]
        %v663 = vld [vmem:[#allocation7 + $0x18] sm:$0xff]
        %v664 = vld [vmem:[#allocation7 + $0x20] sm:$0xff]
        %v665 = vld [vmem:[#allocation7 + $0x28] sm:$0xff]
        %v666 = vld [vmem:[#allocation7 + $0x30] sm:$0xff]
        %v667 = vld [vmem:[#allocation7 + $0x38] sm:$0xff]
        %v668 = vld [vmem:[#allocation7 + $0x40] sm:$0xff]
        %v669 = vld [vmem:[#allocation7 + $0x48] sm:$0xff]
        %v670 = vld [vmem:[#allocation7 + $0x50] sm:$0xff]
        %v671 = vld [vmem:[#allocation7 + $0x58] sm:$0xff]
        %v672 = vld [vmem:[#allocation7 + $0x60] sm:$0xff]
        %v673 = vld [vmem:[#allocation7 + $0x68] sm:$0xff]
        %v674 = vld [vmem:[#allocation7 + $0x70] sm:$0xff]
        %v675 = vld [vmem:[#allocation7 + $0x78] sm:$0xff]
        %677 = vset.pattern.permute.xlu0 0
        %678 = vperm.xlu0 %677, %v660
        %v679 = vpop.permute.xlu0 %678
        %682 = vset.pattern.permute.xlu0 0
        %683 = vperm.xlu0 %682, %v661
        %v684 = vpop.permute.xlu0 %683
        %687 = vset.pattern.permute.xlu0 0
        %688 = vperm.xlu0 %687, %v662
        %v689 = vpop.permute.xlu0 %688
        %692 = vset.pattern.permute.xlu0 0
        %693 = vperm.xlu0 %692, %v663
        %v694 = vpop.permute.xlu0 %693
        %697 = vset.pattern.permute.xlu0 0
        %698 = vperm.xlu0 %697, %v664
        %v699 = vpop.permute.xlu0 %698
        %702 = vset.pattern.permute.xlu0 0
        %703 = vperm.xlu0 %702, %v665
        %v704 = vpop.permute.xlu0 %703
        %707 = vset.pattern.permute.xlu0 0
        %708 = vperm.xlu0 %707, %v666
        %v709 = vpop.permute.xlu0 %708
        %712 = vset.pattern.permute.xlu0 0
        %713 = vperm.xlu0 %712, %v667
        %v714 = vpop.permute.xlu0 %713
        %717 = vset.pattern.permute.xlu0 0
        %718 = vperm.xlu0 %717, %v668
        %v719 = vpop.permute.xlu0 %718
        %722 = vset.pattern.permute.xlu0 0
        %723 = vperm.xlu0 %722, %v669
        %v724 = vpop.permute.xlu0 %723
        %727 = vset.pattern.permute.xlu0 0
        %728 = vperm.xlu0 %727, %v670
        %v729 = vpop.permute.xlu0 %728
        %732 = vset.pattern.permute.xlu0 0
        %733 = vperm.xlu0 %732, %v671
        %v734 = vpop.permute.xlu0 %733
        %737 = vset.pattern.permute.xlu0 0
        %738 = vperm.xlu0 %737, %v672
        %v739 = vpop.permute.xlu0 %738
        %742 = vset.pattern.permute.xlu0 0
        %743 = vperm.xlu0 %742, %v673
        %v744 = vpop.permute.xlu0 %743
        %747 = vset.pattern.permute.xlu0 0
        %748 = vperm.xlu0 %747, %v674
        %v749 = vpop.permute.xlu0 %748
        %752 = vset.pattern.permute.xlu0 0
        %753 = vperm.xlu0 %752, %v675
        %v754 = vpop.permute.xlu0 %753
        %v772 = vunpack.c.l.b16 %v644
        %v773 = vunpack.c.l.b16 %v645
        %v774 = vunpack.c.l.b16 %v646
        %v775 = vunpack.c.l.b16 %v647
        %v776 = vunpack.c.l.b16 %v648
        %v777 = vunpack.c.l.b16 %v649
        %v778 = vunpack.c.l.b16 %v650
        %v779 = vunpack.c.l.b16 %v651
        %v780 = vunpack.c.l.b16 %v652
        %v781 = vunpack.c.l.b16 %v653
        %v782 = vunpack.c.l.b16 %v654
        %v783 = vunpack.c.l.b16 %v655
        %v784 = vunpack.c.l.b16 %v656
        %v785 = vunpack.c.l.b16 %v657
        %v786 = vunpack.c.l.b16 %v658
        %v787 = vunpack.c.l.b16 %v659
        %v788 = vpack.c.b16 %v773, %v772
        %v789 = vpack.c.b16 %v775, %v774
        %v790 = vpack.c.b16 %v777, %v776
        %v791 = vpack.c.b16 %v779, %v778
        %v792 = vpack.c.b16 %v781, %v780
        %v793 = vpack.c.b16 %v783, %v782
        %v794 = vpack.c.b16 %v785, %v784
        %v795 = vpack.c.b16 %v787, %v786
        %vm796 = vcmask 523264
        %v798 = vsel %vm796, %v788, 0
        %v801 = vsel %vm796, %v789, 0
        %v804 = vsel %vm796, %v790, 0
        %v807 = vsel %vm796, %v791, 0
        %v810 = vsel %vm796, %v792, 0
        %v813 = vsel %vm796, %v793, 0
        %v816 = vsel %vm796, %v794, 0
        %v819 = vsel %vm796, %v795, 0
        %821 = vmatprep.subr.bf16.mxu0 0
        %822 = vmatpush1.bf16.msra.mxu0 0
        %823 = vmatprep.subr.bf16.mxu0 0
        %824 = vmatpush1.bf16.msra.mxu0 0
        %825 = vmatprep.subr.bf16.mxu0 0
        %826 = vmatpush1.bf16.msra.mxu0 0
        %827 = vmatprep.subr.bf16.mxu0 0
        %828 = vmatpush1.bf16.msra.mxu0 0
        %829 = vmatprep.subr.bf16.mxu0 0
        %830 = vmatpush1.bf16.msra.mxu0 %v643
        %831 = vmatprep.subr.bf16.mxu0 0
        %832 = vmatpush1.bf16.msra.mxu0 %v642
        %833 = vmatprep.subr.bf16.mxu0 0
        %834 = vmatpush1.bf16.msra.mxu0 %v641
        %835 = vmatprep.subr.bf16.mxu0 0
        %836 = vmatpush1.bf16.msra.mxu0 %v640
        %837 = vmatprep.subr.bf16.mxu0 0
        %838 = vmatpush2.bf16.msra.mxu0 0
        %839 = vmatprep.subr.bf16.mxu0 0
        %840 = vmatpush2.bf16.msra.mxu0 0
        %841 = vmatprep.subr.bf16.mxu0 0
        %842 = vmatpush2.bf16.msra.mxu0 0
        %843 = vmatprep.subr.bf16.mxu0 0
        %844 = vmatpush2.bf16.msra.mxu0 0
        %845 = vmatprep.subr.bf16.mxu0 0
        %846 = vmatpush2.bf16.msra.mxu0 0
        %847 = vmatprep.subr.bf16.mxu0 0
        %848 = vmatpush2.bf16.msra.mxu0 0
        %849 = vmatprep.subr.bf16.mxu0 0
        %850 = vmatpush2.bf16.msra.mxu0 0
        %851 = vmatprep.subr.bf16.mxu0 0
        %852 = vmatpush2.bf16.msra.mxu0 0
        %853 = vmatprep.mubr.bf16.mxu0 0
        %854 = vmatmul.mubr.bf16.gmra.mxu0 %v798
        %v855 = vpop.f32.mrf.mxu0
        %v856 = vadd.f32 %v679, %v855
        %v857 = vpop.f32.mrf.mxu0
        %v858 = vpop.f32.mrf.mxu0
        %v859 = vadd.f32 %v684, %v858
        %v860 = vpop.f32.mrf.mxu0
        %861 = vmatprep.mubr.bf16.mxu0 0
        %862 = vmatmul.mubr.bf16.gmra.mxu0 %v801
        %v863 = vpop.f32.mrf.mxu0
        %v864 = vadd.f32 %v689, %v863
        %v865 = vpop.f32.mrf.mxu0
        %v866 = vpop.f32.mrf.mxu0
        %v867 = vadd.f32 %v694, %v866
        %v868 = vpop.f32.mrf.mxu0
        %869 = vmatprep.mubr.bf16.mxu0 0
        %870 = vmatmul.mubr.bf16.gmra.mxu0 %v804
        %v871 = vpop.f32.mrf.mxu0
        %v872 = vadd.f32 %v699, %v871
        %v873 = vpop.f32.mrf.mxu0
        %v874 = vpop.f32.mrf.mxu0
        %v875 = vadd.f32 %v704, %v874
        %v876 = vpop.f32.mrf.mxu0
        %877 = vmatprep.mubr.bf16.mxu0 0
        %878 = vmatmul.mubr.bf16.gmra.mxu0 %v807
        %v879 = vpop.f32.mrf.mxu0
        %v880 = vadd.f32 %v709, %v879
        %v881 = vpop.f32.mrf.mxu0
        %v882 = vpop.f32.mrf.mxu0
        %v883 = vadd.f32 %v714, %v882
        %v884 = vpop.f32.mrf.mxu0
        %885 = vmatprep.mubr.bf16.mxu0 0
        %886 = vmatmul.mubr.bf16.gmra.mxu0 %v810
        %v887 = vpop.f32.mrf.mxu0
        %v888 = vadd.f32 %v719, %v887
        %v889 = vpop.f32.mrf.mxu0
        %v890 = vpop.f32.mrf.mxu0
        %v891 = vadd.f32 %v724, %v890
        %v892 = vpop.f32.mrf.mxu0
        %893 = vmatprep.mubr.bf16.mxu0 0
        %894 = vmatmul.mubr.bf16.gmra.mxu0 %v813
        %v895 = vpop.f32.mrf.mxu0
        %v896 = vadd.f32 %v729, %v895
        %v897 = vpop.f32.mrf.mxu0
        %v898 = vpop.f32.mrf.mxu0
        %v899 = vadd.f32 %v734, %v898
        %v900 = vpop.f32.mrf.mxu0
        %901 = vmatprep.mubr.bf16.mxu0 0
        %902 = vmatmul.mubr.bf16.gmra.mxu0 %v816
        %v903 = vpop.f32.mrf.mxu0
        %v904 = vadd.f32 %v739, %v903
        %v905 = vpop.f32.mrf.mxu0
        %v906 = vpop.f32.mrf.mxu0
        %v907 = vadd.f32 %v744, %v906
        %v908 = vpop.f32.mrf.mxu0
        %909 = vmatprep.mubr.bf16.mxu0 0
        %910 = vmatmul.mubr.bf16.gmra.mxu0 %v819
        %v911 = vpop.f32.mrf.mxu0
        %v912 = vadd.f32 %v749, %v911
        %v913 = vpop.f32.mrf.mxu0
        %v914 = vpop.f32.mrf.mxu0
        %v915 = vadd.f32 %v754, %v914
        %v916 = vpop.f32.mrf.mxu0
        %917 = vdwg.mxu0
        %v918 = vmax.f32 %v856, 0.0
        %v919 = vmax.f32 %v859, 0.0
        %v920 = vmax.f32 %v864, 0.0
        %v921 = vmax.f32 %v867, 0.0
        %v922 = vmax.f32 %v872, 0.0
        %v923 = vmax.f32 %v875, 0.0
        %v924 = vmax.f32 %v880, 0.0
        %v925 = vmax.f32 %v883, 0.0
        %v926 = vmax.f32 %v888, 0.0
        %v927 = vmax.f32 %v891, 0.0
        %v928 = vmax.f32 %v896, 0.0
        %v929 = vmax.f32 %v899, 0.0
        %v930 = vmax.f32 %v904, 0.0
        %v931 = vmax.f32 %v907, 0.0
        %v932 = vmax.f32 %v912, 0.0
        %v933 = vmax.f32 %v915, 0.0
        %934 = vst [vmem:[%s368] sm:$0xff] %v918
        %935 = vst [vmem:[%s368 + $0x8] sm:$0xff] %v919
        %936 = vst [vmem:[%s368 + $0x10] sm:$0xff] %v920
        %937 = vst [vmem:[%s368 + $0x18] sm:$0xff] %v921
        %938 = vst [vmem:[%s368 + $0x20] sm:$0xff] %v922
        %939 = vst [vmem:[%s368 + $0x28] sm:$0xff] %v923
        %940 = vst [vmem:[%s368 + $0x30] sm:$0xff] %v924
        %941 = vst [vmem:[%s368 + $0x38] sm:$0xff] %v925
        %942 = vst [vmem:[%s368 + $0x40] sm:$0xff] %v926
        %943 = vst [vmem:[%s368 + $0x48] sm:$0xff] %v927
        %944 = vst [vmem:[%s368 + $0x50] sm:$0xff] %v928
        %945 = vst [vmem:[%s368 + $0x58] sm:$0xff] %v929
        %946 = vst [vmem:[%s368 + $0x60] sm:$0xff] %v930
        %947 = vst [vmem:[%s368 + $0x68] sm:$0xff] %v931
        %948 = vst [vmem:[%s368 + $0x70] sm:$0xff] %v932
        %949 = vst [vmem:[%s368 + $0x78] sm:$0xff] %v933
        %p950 = scmp.lt.s32.totalorder %s25, 1
        %s951 = scalar_select %p950, %s25, 1
        %p952 = scmp.lt.s32.totalorder %s26, 0
        %s953 = scalar_select %p952, %s26, 0
        %s954 = smul.addr %s951, 16
        %s955 = sadd.s32 %s953, %s954
        %s956 = smul.addr %s955, 8
        %s957 = scalar_lea.vmem %s7, %s956
        // Predicated region
        $region65: #{mlpnet_relu_forward.1} parent=47 // pred_check
          %p958 = pneg %p207
        $region66: #{mlpnet_relu_forward.1} parent=47 // pred_check_branch
          %960 = sbr.rel (%p958) target = $region68
        $region67: #{mlpnet_relu_forward.1} parent=47 // pred_region
          _
        $region68: #{mlpnet_relu_forward.1} parent=47 // pred_fallthru
          _
      $region48: #{mlpnet_relu_forward.1} parent=5 // pred_fallthru
        _
      %p961 = scmp.le.s32.totalorder 2, %s16
      // Predicated region
      $region69: #{mlpnet_relu_forward.1} parent=5 // pred_check
        %p962 = pneg %p961
      $region70: #{mlpnet_relu_forward.1} parent=5 // pred_check_branch
        %964 = sbr.rel (%p962) target = $region72
      $region71: #{mlpnet_relu_forward.1} parent=5 // pred_region
        %s965 = ssub.s32 %s16, 2
        // Predicated region
        $region73: #{mlpnet_relu_forward.1} parent=71 // pred_check
          %p966 = pneg %p213
        $region74: #{mlpnet_relu_forward.1} parent=71 // pred_check_branch
          %968 = sbr.rel (%p966) target = $region76
        $region75: #{mlpnet_relu_forward.1} parent=71 // pred_region
          %p969 = scmp.lt.s32.totalorder %s27, 1
          %s970 = scalar_select %p969, %s27, 1
          %p971 = scmp.lt.s32.totalorder %s28, 0
          %s972 = scalar_select %p971, %s28, 0
          %s973 = smul.addr %s970, 16
          %s974 = sadd.s32 %s972, %s973
          %s975 = smul.addr %s974, 8
          %s976 = scalar_lea.vmem %s7, %s975
        $region76: #{mlpnet_relu_forward.1} parent=71 // pred_fallthru
          _
      $region72: #{mlpnet_relu_forward.1} parent=5 // pred_fallthru
        _
    $region6: #{mlpnet_relu_forward.1} parent=1 // loop_footer
      %s20 = sadd.s32 1, %s16
    $region7: #{mlpnet_relu_forward.1} parent=1 // loop_footer_branch
      %15 = sbr.rel target = $region3
    $region8: #{mlpnet_relu_forward.1} parent=1 // loop_exit
      _
    %977 = vsyncpa [#allocation3], 1
    %s978 = scalar_lea.sflag [#allocation3], 1
    %979 = vsyncpa %s978, 1
    %980 = vsyncpa [#allocation5], 1
    %981 = vsyncpa [#allocation8], 1

</llo_original>
